<compile_context>
chip_gen: v7x
topology: tpu7x:2x2x1
jax: 0.10.0
libtpu: 0.0.40
codegen_flags: <defaults>
</compile_context>

<pallas_src>
import math

import jax
import jax.numpy as jnp
from jax import lax
from jax.experimental import pallas as pl
from jax.experimental.pallas import tpu as pltpu

EPS = 1e-6
ALPHA = 1.0   # nn.Parameter(torch.ones(1))
BIAS = 1.0    # nn.Parameter(torch.ones(1))


def _residual_kernel(x_ref, w_ref, b_ref, m_ref, o_ref):
    x = x_ref[...].astype(jnp.float32)                  # (tm, D)
    d = x.shape[-1]

    # --- LayerNormalisation (custom: divide by sqrt(std + eps)) ---
    mean = jnp.mean(x, axis=-1, keepdims=True)
    centered = x - mean
    var = jnp.sum(centered * centered, axis=-1, keepdims=True) / max(d - 1, 1)
    std = jnp.sqrt(var)                                  # unbiased std (torch.std)
    normed = ALPHA * centered * lax.rsqrt(std + EPS) + BIAS

    # --- sublayer: Linear(D, D) on the MXU (bf16 inputs, f32 accumulate) ---
    sub = jnp.dot(normed.astype(jnp.bfloat16), w_ref[...],
                  preferred_element_type=jnp.float32) + b_ref[...]

    # --- dropout: pre-scaled keep-mask (0 or 1/(1-p)) computed in the wrapper ---
    dropped = sub * m_ref[...].astype(jnp.float32)

    # --- residual add ---
    o_ref[...] = (x + dropped).astype(o_ref.dtype)


def residual_connection(x, w, b, *, p_drop=0.1, key=None, tm=256):
    """x: (B, S, D) f32; w: (D, D); b: (D,). Returns x + dropout(Linear(norm(x)))."""
    assert 0.0 <= p_drop < 1.0, "p_drop must be in [0, 1)"
    B, S, D = x.shape
    N = B * S
    x2 = x.reshape(N, D)

    # Inverted-dropout keep mask, pre-scaled, built outside the kernel.
    if p_drop > 0.0:
        if key is None:
            key = jax.random.PRNGKey(0)
        keep = jax.random.bernoulli(key, 1.0 - p_drop, (N, D))
        mask = keep.astype(jnp.bfloat16) * jnp.bfloat16(1.0 / (1.0 - p_drop))
    else:
        mask = jnp.ones((N, D), jnp.bfloat16)

    # Row tiling: largest of (tm, N); pad rows to a multiple of the tile.
    tm = min(tm, N)
    pad = (-N) % tm
    if pad:
        x2 = jnp.concatenate([x2, jnp.zeros((pad, D), x2.dtype)], axis=0)
        mask = jnp.concatenate([mask, jnp.zeros((pad, D), mask.dtype)], axis=0)
    Np = N + pad

    w_bf = w.astype(jnp.bfloat16)                        # halves resident VMEM
    b2 = b.reshape(1, D).astype(jnp.float32)

    # TODO(synk): weight/bias blocks are grid-invariant; pipeline_mode=pl.Buffered(1)
    # (or a one-time scratch load) would reclaim their second pipeline buffer on v7x.
    out = pl.pallas_call(
        _residual_kernel,
        out_shape=jax.ShapeDtypeStruct((Np, D), x.dtype),
        grid=(Np // tm,),
        in_specs=[
            pl.BlockSpec((tm, D), lambda i: (i, 0)),     # x rows
            pl.BlockSpec((D, D), lambda i: (0, 0)),      # sublayer weight (resident)
            pl.BlockSpec((1, D), lambda i: (0, 0)),      # sublayer bias
            pl.BlockSpec((tm, D), lambda i: (i, 0)),     # dropout keep-mask
        ],
        out_specs=pl.BlockSpec((tm, D), lambda i: (i, 0)),
        compiler_params=pltpu.CompilerParams(
            dimension_semantics=("parallel",),           # pure map -> both TCs on v7x
            vmem_limit_bytes=64 * 1024 * 1024,
        ),
    )(x2, w_bf, b2, mask)
    return out[:N].reshape(B, S, D)


if __name__ == "__main__":
    B, S, D = 2, 8, 32
    key = jax.random.PRNGKey(0)
    kx, kw, kb, kd = jax.random.split(key, 4)
    x = jax.random.normal(kx, (B, S, D), dtype=jnp.float32)
    # deterministic "sublayer" = Linear(D, D)
    w = jax.random.normal(kw, (D, D), dtype=jnp.float32) / math.sqrt(D)
    b = jax.random.normal(kb, (D,), dtype=jnp.float32) * 0.01

    out = residual_connection(x, w, b, p_drop=0.1, key=kd)
    jax.block_until_ready(out)
    assert out.shape == (B, S, D) and out.dtype == jnp.float32
    assert bool(jnp.all(jnp.isfinite(out)))
    print("KERNEL_OK")
</pallas_src>

<mosaic_0001>
module attributes {stable_mosaic.version = 11 : i64} {
  func.func @_residual_kernel(%arg0: i32, %arg1: memref<16x32xf32, #tpu.memory_space<vmem>>, %arg2: memref<32x32xbf16, #tpu.memory_space<vmem>>, %arg3: memref<1x32xf32, #tpu.memory_space<vmem>>, %arg4: memref<16x32xbf16, #tpu.memory_space<vmem>>, %arg5: memref<16x32xf32, #tpu.memory_space<vmem>>) attributes {dimension_semantics = [#tpu.dimension_semantics<parallel>], iteration_bounds = array<i64: 1>, scalar_prefetch = 0 : i64, scratch_operands = 0 : i64, tpu.core_type = #tpu.core_type<tc>, window_params = [{transform_indices = @transform_0, window_bounds = array<i64: 16, 32>}, {pipeline_mode = #tpu.pipeline_mode<synchronous>, transform_indices = @transform_1, window_bounds = array<i64: 32, 32>}, {pipeline_mode = #tpu.pipeline_mode<synchronous>, transform_indices = @transform_2, window_bounds = array<i64: 1, 32>}, {transform_indices = @transform_3, window_bounds = array<i64: 16, 32>}, {transform_indices = @transform_4, window_bounds = array<i64: 16, 32>}]} {
    %c0 = arith.constant 0 : index
    %c0_0 = arith.constant 0 : index
    %0 = vector.load %arg1[%c0, %c0_0] : memref<16x32xf32, #tpu.memory_space<vmem>>, vector<16x32xf32>
    %cst = arith.constant dense<0.000000e+00> : vector<16xf32>
    %1 = vector.multi_reduction <add>, %0, %cst [1] : vector<16x32xf32> to vector<16xf32>
    %2 = vector.shape_cast %1 : vector<16xf32> to vector<16x1xf32>
    %cst_1 = arith.constant 3.200000e+01 : f32
    %3 = vector.broadcast %cst_1 : f32 to vector<16x1xf32>
    %4 = arith.divf %2, %3 : vector<16x1xf32>
    %5 = vector.broadcast %4 : vector<16x1xf32> to vector<16x32xf32>
    %6 = arith.subf %0, %5 : vector<16x32xf32>
    %7 = arith.mulf %6, %6 : vector<16x32xf32>
    %cst_2 = arith.constant dense<0.000000e+00> : vector<16xf32>
    %8 = vector.multi_reduction <add>, %7, %cst_2 [1] : vector<16x32xf32> to vector<16xf32>
    %9 = vector.shape_cast %8 : vector<16xf32> to vector<16x1xf32>
    %cst_3 = arith.constant 3.100000e+01 : f32
    %10 = vector.broadcast %cst_3 : f32 to vector<16x1xf32>
    %11 = arith.divf %9, %10 : vector<16x1xf32>
    %12 = math.sqrt %11 : vector<16x1xf32>
    %cst_4 = arith.constant 1.000000e+00 : f32
    %13 = vector.broadcast %cst_4 : f32 to vector<16x32xf32>
    %14 = arith.mulf %13, %6 : vector<16x32xf32>
    %cst_5 = arith.constant 9.99999997E-7 : f32
    %15 = vector.broadcast %cst_5 : f32 to vector<16x1xf32>
    %16 = arith.addf %12, %15 : vector<16x1xf32>
    %17 = math.rsqrt %16 : vector<16x1xf32>
    %18 = vector.broadcast %17 : vector<16x1xf32> to vector<16x32xf32>
    %19 = arith.mulf %14, %18 : vector<16x32xf32>
    %cst_6 = arith.constant 1.000000e+00 : f32
    %20 = vector.broadcast %cst_6 : f32 to vector<16x32xf32>
    %21 = arith.addf %19, %20 : vector<16x32xf32>
    %22 = arith.truncf %21 : vector<16x32xf32> to vector<16x32xbf16>
    %c0_7 = arith.constant 0 : index
    %c0_8 = arith.constant 0 : index
    %23 = vector.load %arg2[%c0_7, %c0_8] : memref<32x32xbf16, #tpu.memory_space<vmem>>, vector<32x32xbf16>
    %cst_9 = arith.constant dense<0.000000e+00> : vector<16x32xf32>
    %24 = tpu.matmul %22, %23, %cst_9 {dimension_numbers = #tpu.dot_dimension_numbers<[1], [0], [0], [1], [0, 0, 1, 1], [], []>} : vector<16x32xbf16>, vector<32x32xbf16>, vector<16x32xf32> -> vector<16x32xf32>
    %c0_10 = arith.constant 0 : index
    %c0_11 = arith.constant 0 : index
    %25 = vector.load %arg3[%c0_10, %c0_11] : memref<1x32xf32, #tpu.memory_space<vmem>>, vector<1x32xf32>
    %26 = vector.broadcast %25 : vector<1x32xf32> to vector<16x32xf32>
    %27 = arith.addf %24, %26 : vector<16x32xf32>
    %c0_12 = arith.constant 0 : index
    %c0_13 = arith.constant 0 : index
    %28 = vector.load %arg4[%c0_12, %c0_13] : memref<16x32xbf16, #tpu.memory_space<vmem>>, vector<16x32xbf16>
    %29 = arith.extf %28 : vector<16x32xbf16> to vector<16x32xf32>
    %30 = arith.mulf %27, %29 : vector<16x32xf32>
    %31 = arith.addf %0, %30 : vector<16x32xf32>
    %c0_14 = arith.constant 0 : index
    %c0_15 = arith.constant 0 : index
    %32 = vector.load %arg5[%c0_14, %c0_15] : memref<16x32xf32, #tpu.memory_space<vmem>>, vector<16x32xf32>
    tpu.vector_store %arg5[%c0_14, %c0_15], %31 {strides = array<i32>} : memref<16x32xf32, #tpu.memory_space<vmem>>, vector<16x32xf32>,
    return
  }
  func.func @transform_0(%arg0: i32) -> (i32, i32) {
    %c0_i32 = arith.constant 0 : i32
    %c0_i32_0 = arith.constant 0 : i32
    return %arg0, %c0_i32 : i32, i32
  }
  func.func @transform_1(%arg0: i32) -> (i32, i32) {
    %c0_i32 = arith.constant 0 : i32
    %c0_i32_0 = arith.constant 0 : i32
    %c0_i32_1 = arith.constant 0 : i32
    return %c0_i32, %c0_i32_0 : i32, i32
  }
  func.func @transform_2(%arg0: i32) -> (i32, i32) {
    %c0_i32 = arith.constant 0 : i32
    %c0_i32_0 = arith.constant 0 : i32
    %c0_i32_1 = arith.constant 0 : i32
    return %c0_i32, %c0_i32_0 : i32, i32
  }
  func.func @transform_3(%arg0: i32) -> (i32, i32) {
    %c0_i32 = arith.constant 0 : i32
    %c0_i32_0 = arith.constant 0 : i32
    return %arg0, %c0_i32 : i32, i32
  }
  func.func @transform_4(%arg0: i32) -> (i32, i32) {
    %c0_i32 = arith.constant 0 : i32
    %c0_i32_0 = arith.constant 0 : i32
    return %arg0, %c0_i32 : i32, i32
  }
}

</mosaic_0001>

<llo_original>
// kernel: tpu_custom_call.1
$region0: #{tpu_custom_call.1}
  #allocation0 [shape = 'u32[]', space=smem, size = 0x4, offset = 0x4, fixed_abs, tag = 'smem constant byte address 0x4 - core index']
  #allocation1 [shape = 'u32[144,128]{1,0:T(1,128)}', space=vmem, size = 0x12000, scoped, tag = 'internal scratch']
  %s0 = inlined_call_operand.hbm [shape: f32[16,32], index: 0, kind: input, shape index: {}]
  %s1 = inlined_call_operand.hbm [shape: bf16[32,32], index: 1, kind: input, shape index: {}]
  %s2 = inlined_call_operand.hbm [shape: f32[1,32], index: 2, kind: input, shape index: {}]
  %s3 = inlined_call_operand.hbm [shape: bf16[16,32], index: 3, kind: input, shape index: {}]
  %s4 = inlined_call_operand.hbm [shape: f32[16,32], index: 4, kind: output, shape index: {}]
  %s5 = sld [smem:[#allocation0]]
  $region42: #{tpu_custom_call.1} parent=0
    _
  %s7 = ssub.s32 1, %s5
  %s8 = scalar_select 0, %s7, %s5
  $region1: #{tpu_custom_call.1} parent=0
    #allocation2 [shape = 'u8[8192]{0}', space=vmem, size = 0x2000, scoped, tag = 'input window, operand 0, single buffered']
    #allocation3 [shape = 's32[1]{0}', space=sflag, size = 0x4, scoped, tag = 'scoped memory for tpu_custom_call.1']
    #allocation4 [shape = 's32[1]{0}', space=sflag, size = 0x4, scoped, tag = 'scoped memory for tpu_custom_call.1']
    #allocation5 [shape = 'u8[8192]{0}', space=vmem, size = 0x2000, scoped, tag = 'input window, operand 1, single buffered']
    #allocation6 [shape = 's32[1]{0}', space=sflag, size = 0x4, scoped, tag = 'scoped memory for tpu_custom_call.1']
    #allocation7 [shape = 'u8[512]{0}', space=vmem, size = 0x400, scoped, tag = 'input window, operand 2, single buffered']
    #allocation8 [shape = 'u8[4096]{0}', space=vmem, size = 0x1000, scoped, tag = 'input window, operand 3, single buffered']
    #allocation9 [shape = 's32[1]{0}', space=sflag, size = 0x4, scoped, tag = 'scoped memory for tpu_custom_call.1']
    #allocation10 [shape = 'u8[8192]{0}', space=vmem, size = 0x2000, scoped, tag = 'output window, operand 0, single buffered']
    %9 = vsyncpa [#allocation3], 0
    %10 = vsyncpa [#allocation6], 0
    %11 = vsyncpa [#allocation9], 0
    %12 = vsyncpa [#allocation4], 0
    // Predicated region
    $region2: #{tpu_custom_call.1} parent=1 // pred_check
      _
    $region3: #{tpu_custom_call.1} parent=1 // pred_check_branch
      %14 = sbr.rel (0) target = $region5
    $region4: #{tpu_custom_call.1} parent=1 // pred_region
      %s16 = ssub.s32 256, 256
      %17 = vsyncadd [#allocation3], %s16
      %s18 = sshll.u32 [#allocation2], 4
      %s19 = int_to_ptr.vmem [resolvable:$true] %s18
      %24 = dma.hbm_to_vmem [thread:$0]  %s0, 256, %s19, [#allocation3], 128, 128, 8
    $region5: #{tpu_custom_call.1} parent=1 // pred_fallthru
      _
    // Predicated region
    $region6: #{tpu_custom_call.1} parent=1 // pred_check
      _
    $region7: #{tpu_custom_call.1} parent=1 // pred_check_branch
      %26 = sbr.rel (0) target = $region9
    $region8: #{tpu_custom_call.1} parent=1 // pred_region
      %s28 = ssub.s32 256, 256
      %29 = vsyncadd [#allocation6], %s28
      %s30 = sshll.u32 [#allocation5], 4
      %s31 = int_to_ptr.vmem [resolvable:$true] %s30
      %36 = dma.hbm_to_vmem [thread:$0]  %s1, 256, %s31, [#allocation6], 64, 64, 4
    $region9: #{tpu_custom_call.1} parent=1 // pred_fallthru
      _
    // Predicated region
    $region10: #{tpu_custom_call.1} parent=1 // pred_check
      _
    $region11: #{tpu_custom_call.1} parent=1 // pred_check_branch
      %38 = sbr.rel (0) target = $region13
    $region12: #{tpu_custom_call.1} parent=1 // pred_region
      %s40 = ssub.s32 16, 16
      %41 = vsyncadd [#allocation6], %s40
      %s43 = sshll.u32 [#allocation7], 4
      %s44 = int_to_ptr.vmem [resolvable:$true] %s43
      %46 = dma.hbm_to_vmem [thread:$0]  %s2, 16, %s44, [#allocation6]
    $region13: #{tpu_custom_call.1} parent=1 // pred_fallthru
      _
    // Predicated region
    $region14: #{tpu_custom_call.1} parent=1 // pred_check
      _
    $region15: #{tpu_custom_call.1} parent=1 // pred_check_branch
      %48 = sbr.rel (0) target = $region17
    $region16: #{tpu_custom_call.1} parent=1 // pred_region
      %s50 = ssub.s32 128, 128
      %51 = vsyncadd [#allocation9], %s50
      %s52 = sshll.u32 [#allocation8], 4
      %s53 = int_to_ptr.vmem [resolvable:$true] %s52
      %58 = dma.hbm_to_vmem [thread:$0]  %s3, 128, %s53, [#allocation9], 64, 64, 4
    $region17: #{tpu_custom_call.1} parent=1 // pred_fallthru
      _
    // Predicated region
    $region18: #{tpu_custom_call.1} parent=1 // pred_check
      _
    $region19: #{tpu_custom_call.1} parent=1 // pred_check_branch
      %60 = sbr.rel (0) target = $region21
    $region20: #{tpu_custom_call.1} parent=1 // pred_region
      %61 = dma.done [#allocation3], 256
    $region21: #{tpu_custom_call.1} parent=1 // pred_fallthru
      _
    // Predicated region
    $region22: #{tpu_custom_call.1} parent=1 // pred_check
      _
    $region23: #{tpu_custom_call.1} parent=1 // pred_check_branch
      %63 = sbr.rel (0) target = $region25
    $region24: #{tpu_custom_call.1} parent=1 // pred_region
      %64 = dma.done [#allocation6], 256
    $region25: #{tpu_custom_call.1} parent=1 // pred_fallthru
      _
    // Predicated region
    $region26: #{tpu_custom_call.1} parent=1 // pred_check
      _
    $region27: #{tpu_custom_call.1} parent=1 // pred_check_branch
      %66 = sbr.rel (0) target = $region29
    $region28: #{tpu_custom_call.1} parent=1 // pred_region
      %67 = dma.done [#allocation6], 16
    $region29: #{tpu_custom_call.1} parent=1 // pred_fallthru
      _
    // Predicated region
    $region30: #{tpu_custom_call.1} parent=1 // pred_check
      _
    $region31: #{tpu_custom_call.1} parent=1 // pred_check_branch
      %69 = sbr.rel (0) target = $region33
    $region32: #{tpu_custom_call.1} parent=1 // pred_region
      %70 = dma.done [#allocation9], 128
    $region33: #{tpu_custom_call.1} parent=1 // pred_fallthru
      _
    %v72 = vld [vmem:[#allocation2] sm:$0xff]
    %v73 = vld [vmem:[#allocation2 + $0x8] sm:$0xff]
    %vm74 = vcmask 261120
    %v75 = vsel %vm74, %v72, 0.0
    %76 = vadd.xlane.f32.xlu0 %v75
    %v77 = vpop.xlane.xlu0 %76
    %v78 = vsel %vm74, %v73, 0.0
    %79 = vadd.xlane.f32.xlu0 %v78
    %v80 = vpop.xlane.xlu0 %79
    %v81 = vrcp.pop 32.0
    %v82 = vmul.f32 %v77, %v81
    %v83 = vmul.f32 %v80, %v81
    %v84 = vsub.f32 %v72, %v82
    %v85 = vsub.f32 %v73, %v83
    %v86 = vmul.f32 %v84, %v84
    %v87 = vmul.f32 %v85, %v85
    %v88 = vsel %vm74, %v86, 0.0
    %89 = vadd.xlane.f32.xlu0 %v88
    %v90 = vpop.xlane.xlu0 %89
    %v91 = vsel %vm74, %v87, 0.0
    %92 = vadd.xlane.f32.xlu0 %v91
    %v93 = vpop.xlane.xlu0 %92
    %v94 = vrcp.pop 31.0
    %v95 = vmul.f32 %v90, %v94
    %v96 = vmul.f32 %v93, %v94
    %v97 = vrsqrt.pop %v95
    %v98 = vmul.f32 %v95, %v97
    %vm99 = vcmp.eq.f32.partialorder %v95, inf
    %v100 = vsel %vm99, %v95, %v98
    %vm101 = vcmp.eq.f32.partialorder %v95, 0.0
    %v102 = vand.u32 %v95, 2147483648
    %v103 = vsel %vm101, %v102, %v100
    %v104 = vrsqrt.pop %v96
    %v105 = vmul.f32 %v96, %v104
    %vm106 = vcmp.eq.f32.partialorder %v96, inf
    %v107 = vsel %vm106, %v96, %v105
    %vm108 = vcmp.eq.f32.partialorder %v96, 0.0
    %v109 = vand.u32 %v96, 2147483648
    %v110 = vsel %vm108, %v109, %v107
    %v111 = vadd.f32 %v103, 1e-06
    %v112 = vadd.f32 %v110, 1e-06
    %v113 = vrsqrt.pop %v111
    %v114 = vrsqrt.pop %v112
    %v115 = vmul.f32 %v84, %v113
    %v116 = vmul.f32 %v85, %v114
    %v117 = vadd.f32 %v115, 1.0
    %v118 = vadd.f32 %v116, 1.0
    %v119 = vpack.c.bf16 %v118, %v117
    %v120 = vld [vmem:[#allocation5] sm:$0xf]
    %v121 = vld [vmem:[#allocation5 + $0x4] sm:$0xf]
    %v122 = vld [vmem:[#allocation5 + $0x8] sm:$0xf]
    %v123 = vld [vmem:[#allocation5 + $0xc] sm:$0xf]
    %v124 = vld [vmem:[#allocation7] sm:$0x1]
    %v126 = vlaneseq
    %v127 = vshrl.u32 %v126, 7
    %v128 = vsub.s32 0, %v127
    %v129 = vrot.slane %v124, %v128
    %v135 = vunpack.c.l.b16 %v120
    %v136 = vunpack.c.l.b16 %v121
    %v137 = vunpack.c.l.b16 %v122
    %v138 = vunpack.c.l.b16 %v123
    %v139 = vpack.c.b16 %v136, %v135
    %v140 = vpack.c.b16 %v138, %v137
    %v144 = vsel %vm74, %v119, 0
    %146 = vmatprep.subr.bf16.mxu0 0
    %147 = vmatpush1.bf16.msra.mxu0 %v139
    %148 = vmatprep.subr.bf16.mxu0 0
    %149 = vmatpush1.bf16.msra.mxu0 %v140
    %150 = vmatprep.subr.bf16.mxu0 0
    %151 = vmatpush1.bf16.msra.mxu0 0
    %152 = vmatprep.subr.bf16.mxu0 0
    %153 = vmatpush1.bf16.msra.mxu0 0
    %154 = vmatprep.subr.bf16.mxu0 0
    %155 = vmatpush1.bf16.msra.mxu0 0
    %156 = vmatprep.subr.bf16.mxu0 0
    %157 = vmatpush1.bf16.msra.mxu0 0
    %158 = vmatprep.subr.bf16.mxu0 0
    %159 = vmatpush1.bf16.msra.mxu0 0
    %160 = vmatprep.subr.bf16.mxu0 0
    %161 = vmatpush1.bf16.msra.mxu0 0
    %162 = vmatprep.subr.bf16.mxu0 0
    %163 = vmatpush1.bf16.msra.mxu0 0
    %164 = vmatprep.subr.bf16.mxu0 0
    %165 = vmatpush1.bf16.msra.mxu0 0
    %166 = vmatprep.subr.bf16.mxu0 0
    %167 = vmatpush1.bf16.msra.mxu0 0
    %168 = vmatprep.subr.bf16.mxu0 0
    %169 = vmatpush1.bf16.msra.mxu0 0
    %170 = vmatprep.subr.bf16.mxu0 0
    %171 = vmatpush1.bf16.msra.mxu0 0
    %172 = vmatprep.subr.bf16.mxu0 0
    %173 = vmatpush1.bf16.msra.mxu0 0
    %174 = vmatprep.subr.bf16.mxu0 0
    %175 = vmatpush1.bf16.msra.mxu0 0
    %176 = vmatprep.subr.bf16.mxu0 0
    %177 = vmatpush1.bf16.msra.mxu0 0
    %178 = vmatprep.mubr.bf16.mxu0 0
    %179 = vmatmul.mubr.bf16.gmra.mrb[0].mxu0 %v144
    %v180 = vpop.f32.mrb[0].mxu0
    %v181 = vadd.f32 %v129, %v180
    %v182 = vpop.f32.mrb[0].mxu0
    %v183 = vpop.f32.mrb[0].mxu0
    %v184 = vadd.f32 %v129, %v183
    %v185 = vpop.f32.mrb[0].mxu0
    %186 = vdwg.mxu0
    %v187 = vld [vmem:[#allocation8] sm:$0xf]
    %v188 = vld [vmem:[#allocation8 + $0x4] sm:$0xf]
    %v189 = vunpack.c.l.bf16 %v187
    %v190 = vunpack.c.l.bf16 %v188
    %v191 = vmul.f32 %v181, %v189
    %v192 = vmul.f32 %v184, %v190
    %v193 = vadd.f32 %v72, %v191
    %v194 = vadd.f32 %v73, %v192
    %195 = vst.msk [vmem:[#allocation10] sm:$0xff] %vm74, %v193
    %196 = vst.msk [vmem:[#allocation10 + $0x8] sm:$0xff] %vm74, %v194
    // Predicated region
    $region34: #{tpu_custom_call.1} parent=1 // pred_check
      _
    $region35: #{tpu_custom_call.1} parent=1 // pred_check_branch
      %198 = sbr.rel (0) target = $region37
    $region36: #{tpu_custom_call.1} parent=1 // pred_region
      %s200 = ssub.s32 256, 256
      %201 = vsyncadd [#allocation4], %s200
      %s202 = sshll.u32 [#allocation10], 4
      %s203 = int_to_ptr.vmem [resolvable:$true] %s202
      %208 = dma.vmem_to_hbm [thread:$0]  %s203, 256, %s4, [#allocation4], 128, 128, 8
    $region37: #{tpu_custom_call.1} parent=1 // pred_fallthru
      _
    // Predicated region
    $region38: #{tpu_custom_call.1} parent=1 // pred_check
      _
    $region39: #{tpu_custom_call.1} parent=1 // pred_check_branch
      %210 = sbr.rel (0) target = $region41
    $region40: #{tpu_custom_call.1} parent=1 // pred_region
      %211 = dma.done [#allocation4], 256
    $region41: #{tpu_custom_call.1} parent=1 // pred_fallthru
      _
    %212 = vsyncpa [#allocation3], 1
    %213 = vsyncpa [#allocation6], 1
    %214 = vsyncpa [#allocation9], 1
    %215 = vsyncpa [#allocation4], 1

</llo_original>
